<compile_context>
chip_gen: v6e
topology: v6e:2x2x1
jax: 0.10.0
libtpu: 0.0.40
codegen_flags: <defaults>
</compile_context>

<pallas_src>
import jax
import jax.numpy as jnp
from jax.experimental import pallas as pl
from jax.experimental.pallas import tpu as pltpu

LANE = 128


# ----------------------------- Pallas kernels --------------------------------
def gcn_layer1_kernel(a_ref, xw1_ref, b1_ref, h1_ref, acc_ref):
    """Accumulate A_hat @ (X W1) over the K grid axis; H1 = relu(acc + b1)."""
    k = pl.program_id(1)
    tk = a_ref.shape[1]

    @pl.when(k == 0)
    def _():
        acc_ref[...] = jnp.zeros_like(acc_ref)

    off = pl.multiple_of(k * tk, tk)
    # bf16 operands, f32 accumulation on the MXU; RHS is VMEM-resident.
    acc_ref[...] += jnp.dot(a_ref[...], xw1_ref[pl.ds(off, tk), :],
                            preferred_element_type=jnp.float32)

    @pl.when(k == pl.num_programs(1) - 1)
    def _():
        h1 = jnp.maximum(acc_ref[...] + b1_ref[...], 0.0)   # f32 epilogue
        h1_ref[...] = h1.astype(h1_ref.dtype)                # bf16 for layer 2


def gcn_layer2_cls_kernel(a_ref, h1_ref, w23_ref, b23_ref, o_ref, acc_ref):
    """Accumulate A_hat @ H1 over K; out = acc @ (W2 W3) + (b2 W3 + b3)."""
    k = pl.program_id(1)
    tk = a_ref.shape[1]

    @pl.when(k == 0)
    def _():
        acc_ref[...] = jnp.zeros_like(acc_ref)

    off = pl.multiple_of(k * tk, tk)
    acc_ref[...] += jnp.dot(a_ref[...], h1_ref[pl.ds(off, tk), :],
                            preferred_element_type=jnp.float32)

    @pl.when(k == pl.num_programs(1) - 1)
    def _():
        out = jnp.dot(acc_ref[...].astype(jnp.bfloat16), w23_ref[...],
                      preferred_element_type=jnp.float32) + b23_ref[...]
        o_ref[...] = out.astype(o_ref.dtype)


# ------------------------------ helpers ---------------------------------------
def _round_up(v, m):
    return ((v + m - 1) // m) * m


def _choose_tiling(n, max_tile=512):
    """Return (n_pad, tile): n_pad multiple of tile, padding waste <= 12.5%.

    Tiles are multiples of 256 when possible (v6e/v7x MXU is 2x256x256); small
    graphs use a single full-size tile (>= 128 for lane/(8,128) alignment).
    """
    n128 = _round_up(max(n, 1), LANE)
    if n128 <= max_tile:
        return n128, n128
    for tile in (max_tile, 256, 128):
        n_pad = _round_up(n128, tile)
        if n_pad - n128 <= n128 // 8:
            return n_pad, tile
    return n128, 128


def _vmem_limit_bytes(n_pad, tm, tk, h1p, clsp):
    est = (
        2 * tm * tk * 2              # double-buffered A_hat tiles (bf16)
        + 2 * n_pad * h1p * 2        # resident activation (bf16, 2 buffers)
        + 2 * h1p * clsp * 2         # W23 (bf16)
        + 2 * 2 * (h1p + clsp) * 4   # biases (f32)
        + tm * h1p * 4               # f32 accumulator scratch
        + 2 * tm * max(2 * h1p, 4 * clsp)   # output tiles
    )
    # Clamp to 48 MiB: safe under v7x's 64 MiB/TC; v5e/v6e (128 MiB) have slack.
    return int(min(max(2 * est, 32 << 20), 48 << 20))


def build_normalized_adjacency_padded(edge_index, edge_attr, num_nodes, n_pad,
                                      out_dtype=jnp.bfloat16):
    """Dense GCN normalization (PyG gcn_norm semantics), built directly padded.

    Edges flow source -> target; existing self-loop weights are kept, nodes
    without a self-loop get weight 1; degrees at the target node.  Padded
    rows/cols stay exactly zero.
    """
    src = edge_index[0]
    dst = edge_index[1]
    w = edge_attr.astype(jnp.float32)
    is_self = src == dst

    a = jnp.zeros((n_pad, n_pad), jnp.float32)
    a = a.at[dst, src].add(jnp.where(is_self, 0.0, w))        # off-diagonal part

    self_w = jnp.zeros((n_pad,), jnp.float32).at[src].add(
        jnp.where(is_self, w, 0.0))
    has_self = jnp.zeros((n_pad,), jnp.float32).at[src].add(
        jnp.where(is_self, 1.0, 0.0))
    ids = jnp.arange(n_pad)
    diag = jnp.where(ids < num_nodes,
                     jnp.where(has_self > 0, self_w, 1.0), 0.0)
    a = a.at[ids, ids].add(diag)

    deg = a.sum(axis=1)
    dinv = jnp.where(deg > 0, jax.lax.rsqrt(deg), 0.0)
    # normalize + cast fuse into a single pass under jit
    return (dinv[:, None] * a * dinv[None, :]).astype(out_dtype)


# ------------------------------ JAX wrapper -----------------------------------
def emotional_graph_network(x, edge_index, edge_attr, params, *, max_tile=512):
    """Fused GCN -> ReLU -> (dropout=identity) -> GCN -> Linear forward pass."""
    w1, b1, w2, b2, w3, b3 = params
    n, _ = x.shape
    num_classes = w3.shape[1]

    h1p = _round_up(w1.shape[1], LANE)        # hidden (128)
    clsp = _round_up(num_classes, LANE)       # classifier out, lane-dense
    n_pad, tile = _choose_tiling(n, max_tile)
    tm = tk = tile
    grid = (n_pad // tm, n_pad // tk)

    # Padded bf16 normalized adjacency built in one pass inside this jit.
    a_p = build_normalized_adjacency_padded(edge_index, edge_attr, n, n_pad,
                                            jnp.bfloat16)

    # Wrapper-side folds (exact): XW1 = X @ W1; W23 = W2 @ W3; b23 = b2 W3 + b3.
    xw1 = x.astype(jnp.float32) @ w1.astype(jnp.float32)                  # (n, 128)
    w23 = w2.astype(jnp.float32) @ w3.astype(jnp.float32)                 # (128, C)
    b23 = b2.astype(jnp.float32) @ w3.astype(jnp.float32) + b3.astype(jnp.float32)

    def pad2(arr, rows, cols, dtype):
        arr = arr.astype(dtype)
        return jnp.pad(arr, ((0, rows - arr.shape[0]), (0, cols - arr.shape[1])))

    xw1_p = pad2(xw1, n_pad, h1p, jnp.bfloat16)
    w23_p = pad2(w23, h1p, clsp, jnp.bfloat16)
    b1_p = pad2(b1.reshape(1, -1), 1, h1p, jnp.float32)
    b23_p = pad2(b23.reshape(1, -1), 1, clsp, jnp.float32)

    cparams = pltpu.CompilerParams(
        dimension_semantics=("parallel", "arbitrary"),
        vmem_limit_bytes=_vmem_limit_bytes(n_pad, tm, tk, h1p, clsp))

    # ---- layer 1: H1 = relu(A_hat @ (X W1) + b1), stored bf16 ----------------
    ce1 = pl.CostEstimate(
        flops=2 * n_pad * n_pad * h1p,
        transcendentals=0,
        bytes_accessed=(2 * n_pad * n_pad          # A_hat (bf16, streamed once)
                        + 2 * n_pad * h1p          # XW1 (bf16, resident)
                        + 4 * h1p                  # b1
                        + 2 * n_pad * h1p))        # H1 writeback (bf16)
    h1 = pl.pallas_call(
        gcn_layer1_kernel,
        out_shape=jax.ShapeDtypeStruct((n_pad, h1p), jnp.bfloat16),
        grid_spec=pltpu.PrefetchScalarGridSpec(
            num_scalar_prefetch=0,
            grid=grid,
            in_specs=[
                pl.BlockSpec((tm, tk), lambda i, k: (i, k)),      # A_hat tile
                pl.BlockSpec((n_pad, h1p), lambda i, k: (0, 0)),  # XW1, resident
                pl.BlockSpec((1, h1p), lambda i, k: (0, 0)),      # b1
            ],
            out_specs=pl.BlockSpec((tm, h1p), lambda i, k: (i, 0)),
            scratch_shapes=[pltpu.VMEM((tm, h1p), jnp.float32)]),
        compiler_params=cparams,
        cost_estimate=ce1,
    )(a_p, xw1_p, b1_p)

    # ---- layer 2 + classifier: (A_hat @ H1) @ (W2 W3) + (b2 W3 + b3) ---------
    ce2 = pl.CostEstimate(
        flops=2 * n_pad * n_pad * h1p + 2 * n_pad * h1p * clsp,
        transcendentals=0,
        bytes_accessed=(2 * n_pad * n_pad          # A_hat
                        + 2 * n_pad * h1p          # H1 (resident)
                        + 2 * h1p * clsp + 4 * clsp
                        + 4 * n_pad * clsp))       # output (f32)
    out_p = pl.pallas_call(
        gcn_layer2_cls_kernel,
        out_shape=jax.ShapeDtypeStruct((n_pad, clsp), jnp.float32),
        grid_spec=pltpu.PrefetchScalarGridSpec(
            num_scalar_prefetch=0,
            grid=grid,
            in_specs=[
                pl.BlockSpec((tm, tk), lambda i, k: (i, k)),      # A_hat tile
                pl.BlockSpec((n_pad, h1p), lambda i, k: (0, 0)),  # H1, resident
                pl.BlockSpec((h1p, clsp), lambda i, k: (0, 0)),   # W23
                pl.BlockSpec((1, clsp), lambda i, k: (0, 0)),     # b23
            ],
            out_specs=pl.BlockSpec((tm, clsp), lambda i, k: (i, 0)),
            scratch_shapes=[pltpu.VMEM((tm, h1p), jnp.float32)]),
        compiler_params=cparams,
        cost_estimate=ce2,
    )(a_p, h1, w23_p, b23_p)

    return out_p[:n, :num_classes]


# ------------------------------ init ------------------------------------------
def init_params(key, in_channels, num_classes):
    """Deterministic Glorot-uniform weights, zero biases (shapes from __init__)."""
    k1, k2, k3 = jax.random.split(key, 3)

    def glorot(k, fan_in, fan_out):
        lim = jnp.sqrt(6.0 / (fan_in + fan_out))
        return jax.random.uniform(k, (fan_in, fan_out), jnp.float32, -lim, lim)

    w1 = glorot(k1, in_channels, 128)
    b1 = jnp.zeros((128,), jnp.float32)
    w2 = glorot(k2, 128, 64)
    b2 = jnp.zeros((64,), jnp.float32)
    w3 = glorot(k3, 64, num_classes)
    b3 = jnp.zeros((num_classes,), jnp.float32)
    return (w1, b1, w2, b2, w3, b3)


# ------------------------------- Driver ----------------------------------------
if __name__ == "__main__":
    NUM_NODES = 16
    NUM_EDGES = 32
    IN_CHANNELS = 16
    NUM_EMOTION_CLASSES = 8

    key = jax.random.PRNGKey(0)
    kx, ke, kw, kp = jax.random.split(key, 4)

    x = jax.random.normal(kx, (NUM_NODES, IN_CHANNELS), jnp.float32)
    edge_index = jax.random.randint(ke, (2, NUM_EDGES), 0, NUM_NODES, jnp.int32)
    edge_attr = jax.random.uniform(kw, (NUM_EDGES,), jnp.float32, 0.1, 1.0)
    params = init_params(kp, IN_CHANNELS, NUM_EMOTION_CLASSES)

    fwd = jax.jit(emotional_graph_network)
    out = fwd(x, edge_index, edge_attr, params)
    jax.block_until_ready(out)

    # Pure-JAX f32 reference of the forward pass (kernel uses bf16 MXU
    # operands -> loosened tolerance).
    w1, b1, w2, b2, w3, b3 = params
    a_ref = build_normalized_adjacency_padded(edge_index, edge_attr,
                                              NUM_NODES, NUM_NODES, jnp.float32)
    h1_ref = jnp.maximum(a_ref @ (x @ w1) + b1[None, :], 0.0)
    h2_ref = a_ref @ (h1_ref @ w2) + b2[None, :]
    ref = h2_ref @ w3 + b3[None, :]

    assert out.shape == (NUM_NODES, NUM_EMOTION_CLASSES)
    assert jnp.allclose(out, ref, atol=5e-2, rtol=5e-2), (
        float(jnp.max(jnp.abs(out - ref))))

    print("KERNEL_OK")
</pallas_src>

<mosaic_0001>
module attributes {stable_mosaic.version = 11 : i64} {
  func.func private @main(%arg0: i32) attributes {dimension_semantics = [#tpu.dimension_semantics<core_parallel>], iteration_bounds = array<i64: 2>, tpu.core_type = #tpu.core_type<sc_scalar_subcore>, window_params = []} {
    return
  }
}

module attributes {stable_mosaic.version = 11 : i64} {
  func.func private @main(%arg0: i32) attributes {dimension_semantics = [#tpu.dimension_semantics<core_parallel>], iteration_bounds = array<i64: 2>, tpu.core_type = #tpu.core_type<sc_scalar_subcore>, window_params = []} {
    return
  }
}

module attributes {stable_mosaic.version = 11 : i64} {
  func.func @gcn_layer1_kernel(%arg0: i32, %arg1: i32, %arg2: memref<128x128xbf16, #tpu.memory_space<vmem>>, %arg3: memref<128x128xbf16, #tpu.memory_space<vmem>>, %arg4: memref<1x128xf32, #tpu.memory_space<vmem>>, %arg5: memref<128x128xbf16, #tpu.memory_space<vmem>>, %arg6: memref<128x128xf32, #tpu.memory_space<vmem>>) attributes {dimension_semantics = [#tpu.dimension_semantics<parallel>, #tpu.dimension_semantics<arbitrary>], iteration_bounds = array<i64: 1, 1>, scalar_prefetch = 0 : i64, scratch_operands = 1 : i64, tpu.core_type = #tpu.core_type<tc>, window_params = [{transform_indices = @transform_0, window_bounds = array<i64: 128, 128>}, {pipeline_mode = #tpu.pipeline_mode<synchronous>, transform_indices = @transform_1, window_bounds = array<i64: 128, 128>}, {pipeline_mode = #tpu.pipeline_mode<synchronous>, transform_indices = @transform_2, window_bounds = array<i64: 1, 128>}, {transform_indices = @transform_3, window_bounds = array<i64: 128, 128>}]} {
    %c0_i32 = arith.constant 0 : i32
    %0 = arith.cmpi eq, %arg1, %c0_i32 : i32
    %1 = arith.extui %0 : i1 to i32
    %c0_i32_0 = arith.constant 0 : i32
    %2 = arith.cmpi ne, %1, %c0_i32_0 : i32
    scf.if %2 {
      %cst_9 = arith.constant 0.000000e+00 : f32
      %15 = vector.broadcast %cst_9 : f32 to vector<128x128xf32>
      %c0_10 = arith.constant 0 : index
      %c0_11 = arith.constant 0 : index
      %16 = vector.load %arg6[%c0_10, %c0_11] : memref<128x128xf32, #tpu.memory_space<vmem>>, vector<128x128xf32>
      tpu.vector_store %arg6[%c0_10, %c0_11], %15 {strides = array<i32>} : memref<128x128xf32, #tpu.memory_space<vmem>>, vector<128x128xf32>,
    } else {
    }
    %c128_i32 = arith.constant 128 : i32
    %3 = arith.muli %arg1, %c128_i32 : i32
    %4 = tpu.assume_multiple %3, 128 : i32
    %c0 = arith.constant 0 : index
    %c0_1 = arith.constant 0 : index
    %5 = vector.load %arg6[%c0, %c0_1] : memref<128x128xf32, #tpu.memory_space<vmem>>, vector<128x128xf32>
    %c0_2 = arith.constant 0 : index
    %c0_3 = arith.constant 0 : index
    %6 = vector.load %arg2[%c0_2, %c0_3] : memref<128x128xbf16, #tpu.memory_space<vmem>>, vector<128x128xbf16>
    %7 = arith.index_cast %4 : i32 to index
    %c0_4 = arith.constant 0 : index
    %8 = vector.load %arg3[%7, %c0_4] : memref<128x128xbf16, #tpu.memory_space<vmem>>, vector<128x128xbf16>
    %cst = arith.constant dense<0.000000e+00> : vector<128x128xf32>
    %9 = tpu.matmul %6, %8, %cst {dimension_numbers = #tpu.dot_dimension_numbers<[1], [0], [0], [1], [0, 0, 1, 1], [], []>} : vector<128x128xbf16>, vector<128x128xbf16>, vector<128x128xf32> -> vector<128x128xf32>
    %10 = arith.addf %5, %9 : vector<128x128xf32>
    %c0_5 = arith.constant 0 : index
    %c0_6 = arith.constant 0 : index
    %11 = vector.load %arg6[%c0_5, %c0_6] : memref<128x128xf32, #tpu.memory_space<vmem>>, vector<128x128xf32>
    tpu.vector_store %arg6[%c0_5, %c0_6], %10 {strides = array<i32>} : memref<128x128xf32, #tpu.memory_space<vmem>>, vector<128x128xf32>,
    %c0_i32_7 = arith.constant 0 : i32
    %12 = arith.cmpi eq, %arg1, %c0_i32_7 : i32
    %13 = arith.extui %12 : i1 to i32
    %c0_i32_8 = arith.constant 0 : i32
    %14 = arith.cmpi ne, %13, %c0_i32_8 : i32
    scf.if %14 {
      %c0_9 = arith.constant 0 : index
      %c0_10 = arith.constant 0 : index
      %15 = vector.load %arg6[%c0_9, %c0_10] : memref<128x128xf32, #tpu.memory_space<vmem>>, vector<128x128xf32>
      %c0_11 = arith.constant 0 : index
      %c0_12 = arith.constant 0 : index
      %16 = vector.load %arg4[%c0_11, %c0_12] : memref<1x128xf32, #tpu.memory_space<vmem>>, vector<1x128xf32>
      %17 = vector.broadcast %16 : vector<1x128xf32> to vector<128x128xf32>
      %18 = arith.addf %15, %17 : vector<128x128xf32>
      %cst_13 = arith.constant 0.000000e+00 : f32
      %19 = vector.broadcast %cst_13 : f32 to vector<128x128xf32>
      %20 = arith.maximumf %18, %19 : vector<128x128xf32>
      %21 = arith.truncf %20 : vector<128x128xf32> to vector<128x128xbf16>
      %c0_14 = arith.constant 0 : index
      %c0_15 = arith.constant 0 : index
      %22 = vector.load %arg5[%c0_14, %c0_15] : memref<128x128xbf16, #tpu.memory_space<vmem>>, vector<128x128xbf16>
      tpu.vector_store %arg5[%c0_14, %c0_15], %21 {strides = array<i32>} : memref<128x128xbf16, #tpu.memory_space<vmem>>, vector<128x128xbf16>,
    } else {
    }
    return
  }
  func.func @transform_0(%arg0: i32, %arg1: i32) -> (i32, i32) {
    %c0_i32 = arith.constant 0 : i32
    return %arg0, %arg1 : i32, i32
  }
  func.func @transform_1(%arg0: i32, %arg1: i32) -> (i32, i32) {
    %c0_i32 = arith.constant 0 : i32
    %c0_i32_0 = arith.constant 0 : i32
    %c0_i32_1 = arith.constant 0 : i32
    return %c0_i32, %c0_i32_0 : i32, i32
  }
  func.func @transform_2(%arg0: i32, %arg1: i32) -> (i32, i32) {
    %c0_i32 = arith.constant 0 : i32
    %c0_i32_0 = arith.constant 0 : i32
    %c0_i32_1 = arith.constant 0 : i32
    return %c0_i32, %c0_i32_0 : i32, i32
  }
  func.func @transform_3(%arg0: i32, %arg1: i32) -> (i32, i32) {
    %c0_i32 = arith.constant 0 : i32
    %c0_i32_0 = arith.constant 0 : i32
    return %arg0, %c0_i32 : i32, i32
  }
}

module attributes {stable_mosaic.version = 11 : i64} {
  func.func @gcn_layer2_cls_kernel(%arg0: i32, %arg1: i32, %arg2: memref<128x128xbf16, #tpu.memory_space<vmem>>, %arg3: memref<128x128xbf16, #tpu.memory_space<vmem>>, %arg4: memref<128x128xbf16, #tpu.memory_space<vmem>>, %arg5: memref<1x128xf32, #tpu.memory_space<vmem>>, %arg6: memref<128x128xf32, #tpu.memory_space<vmem>>, %arg7: memref<128x128xf32, #tpu.memory_space<vmem>>) attributes {dimension_semantics = [#tpu.dimension_semantics<parallel>, #tpu.dimension_semantics<arbitrary>], iteration_bounds = array<i64: 1, 1>, scalar_prefetch = 0 : i64, scratch_operands = 1 : i64, tpu.core_type = #tpu.core_type<tc>, window_params = [{transform_indices = @transform_0, window_bounds = array<i64: 128, 128>}, {pipeline_mode = #tpu.pipeline_mode<synchronous>, transform_indices = @transform_1, window_bounds = array<i64: 128, 128>}, {pipeline_mode = #tpu.pipeline_mode<synchronous>, transform_indices = @transform_2, window_bounds = array<i64: 128, 128>}, {pipeline_mode = #tpu.pipeline_mode<synchronous>, transform_indices = @transform_3, window_bounds = array<i64: 1, 128>}, {transform_indices = @transform_4, window_bounds = array<i64: 128, 128>}]} {
    %c0_i32 = arith.constant 0 : i32
    %0 = arith.cmpi eq, %arg1, %c0_i32 : i32
    %1 = arith.extui %0 : i1 to i32
    %c0_i32_0 = arith.constant 0 : i32
    %2 = arith.cmpi ne, %1, %c0_i32_0 : i32
    scf.if %2 {
      %cst_9 = arith.constant 0.000000e+00 : f32
      %15 = vector.broadcast %cst_9 : f32 to vector<128x128xf32>
      %c0_10 = arith.constant 0 : index
      %c0_11 = arith.constant 0 : index
      %16 = vector.load %arg7[%c0_10, %c0_11] : memref<128x128xf32, #tpu.memory_space<vmem>>, vector<128x128xf32>
      tpu.vector_store %arg7[%c0_10, %c0_11], %15 {strides = array<i32>} : memref<128x128xf32, #tpu.memory_space<vmem>>, vector<128x128xf32>,
    } else {
    }
    %c128_i32 = arith.constant 128 : i32
    %3 = arith.muli %arg1, %c128_i32 : i32
    %4 = tpu.assume_multiple %3, 128 : i32
    %c0 = arith.constant 0 : index
    %c0_1 = arith.constant 0 : index
    %5 = vector.load %arg7[%c0, %c0_1] : memref<128x128xf32, #tpu.memory_space<vmem>>, vector<128x128xf32>
    %c0_2 = arith.constant 0 : index
    %c0_3 = arith.constant 0 : index
    %6 = vector.load %arg2[%c0_2, %c0_3] : memref<128x128xbf16, #tpu.memory_space<vmem>>, vector<128x128xbf16>
    %7 = arith.index_cast %4 : i32 to index
    %c0_4 = arith.constant 0 : index
    %8 = vector.load %arg3[%7, %c0_4] : memref<128x128xbf16, #tpu.memory_space<vmem>>, vector<128x128xbf16>
    %cst = arith.constant dense<0.000000e+00> : vector<128x128xf32>
    %9 = tpu.matmul %6, %8, %cst {dimension_numbers = #tpu.dot_dimension_numbers<[1], [0], [0], [1], [0, 0, 1, 1], [], []>} : vector<128x128xbf16>, vector<128x128xbf16>, vector<128x128xf32> -> vector<128x128xf32>
    %10 = arith.addf %5, %9 : vector<128x128xf32>
    %c0_5 = arith.constant 0 : index
    %c0_6 = arith.constant 0 : index
    %11 = vector.load %arg7[%c0_5, %c0_6] : memref<128x128xf32, #tpu.memory_space<vmem>>, vector<128x128xf32>
    tpu.vector_store %arg7[%c0_5, %c0_6], %10 {strides = array<i32>} : memref<128x128xf32, #tpu.memory_space<vmem>>, vector<128x128xf32>,
    %c0_i32_7 = arith.constant 0 : i32
    %12 = arith.cmpi eq, %arg1, %c0_i32_7 : i32
    %13 = arith.extui %12 : i1 to i32
    %c0_i32_8 = arith.constant 0 : i32
    %14 = arith.cmpi ne, %13, %c0_i32_8 : i32
    scf.if %14 {
      %c0_9 = arith.constant 0 : index
      %c0_10 = arith.constant 0 : index
      %15 = vector.load %arg7[%c0_9, %c0_10] : memref<128x128xf32, #tpu.memory_space<vmem>>, vector<128x128xf32>
      %16 = arith.truncf %15 : vector<128x128xf32> to vector<128x128xbf16>
      %c0_11 = arith.constant 0 : index
      %c0_12 = arith.constant 0 : index
      %17 = vector.load %arg4[%c0_11, %c0_12] : memref<128x128xbf16, #tpu.memory_space<vmem>>, vector<128x128xbf16>
      %cst_13 = arith.constant dense<0.000000e+00> : vector<128x128xf32>
      %18 = tpu.matmul %16, %17, %cst_13 {dimension_numbers = #tpu.dot_dimension_numbers<[1], [0], [0], [1], [0, 0, 1, 1], [], []>} : vector<128x128xbf16>, vector<128x128xbf16>, vector<128x128xf32> -> vector<128x128xf32>
      %c0_14 = arith.constant 0 : index
      %c0_15 = arith.constant 0 : index
      %19 = vector.load %arg5[%c0_14, %c0_15] : memref<1x128xf32, #tpu.memory_space<vmem>>, vector<1x128xf32>
      %20 = vector.broadcast %19 : vector<1x128xf32> to vector<128x128xf32>
      %21 = arith.addf %18, %20 : vector<128x128xf32>
      %c0_16 = arith.constant 0 : index
      %c0_17 = arith.constant 0 : index
      %22 = vector.load %arg6[%c0_16, %c0_17] : memref<128x128xf32, #tpu.memory_space<vmem>>, vector<128x128xf32>
      tpu.vector_store %arg6[%c0_16, %c0_17], %21 {strides = array<i32>} : memref<128x128xf32, #tpu.memory_space<vmem>>, vector<128x128xf32>,
    } else {
    }
    return
  }
  func.func @transform_0(%arg0: i32, %arg1: i32) -> (i32, i32) {
    %c0_i32 = arith.constant 0 : i32
    return %arg0, %arg1 : i32, i32
  }
  func.func @transform_1(%arg0: i32, %arg1: i32) -> (i32, i32) {
    %c0_i32 = arith.constant 0 : i32
    %c0_i32_0 = arith.constant 0 : i32
    %c0_i32_1 = arith.constant 0 : i32
    return %c0_i32, %c0_i32_0 : i32, i32
  }
  func.func @transform_2(%arg0: i32, %arg1: i32) -> (i32, i32) {
    %c0_i32 = arith.constant 0 : i32
    %c0_i32_0 = arith.constant 0 : i32
    %c0_i32_1 = arith.constant 0 : i32
    return %c0_i32, %c0_i32_0 : i32, i32
  }
  func.func @transform_3(%arg0: i32, %arg1: i32) -> (i32, i32) {
    %c0_i32 = arith.constant 0 : i32
    %c0_i32_0 = arith.constant 0 : i32
    %c0_i32_1 = arith.constant 0 : i32
    return %c0_i32, %c0_i32_0 : i32, i32
  }
  func.func @transform_4(%arg0: i32, %arg1: i32) -> (i32, i32) {
    %c0_i32 = arith.constant 0 : i32
    %c0_i32_0 = arith.constant 0 : i32
    return %arg0, %c0_i32 : i32, i32
  }
}

</mosaic_0001>

<llo_original>
// kernel: emotional_graph_network.3
$region0: #{emotional_graph_network.3}
  #allocation0 [shape = 'u32[]', space=smem, size = 0x4, offset = 0x4, fixed_abs, tag = 'smem constant byte address 0x4 - core index']
  #allocation1 [shape = 'u32[144,128]{1,0:T(1,128)}', space=vmem, size = 0x12000, scoped, tag = 'internal scratch']
  #allocation2 [shape = 'f32[128,128]{1,0:T(8,128)}', space=vmem, size = 0x10000, scoped, tag = 'scratch operand']
  %s0 = inlined_call_operand.vmem [shape: bf16[128,128], index: 0, kind: input, shape index: {}]
  %s1 = inlined_call_operand.vmem [shape: bf16[128,128], index: 1, kind: input, shape index: {}]
  %s2 = inlined_call_operand.vmem [shape: bf16[128,128], index: 2, kind: input, shape index: {}]
  %s3 = inlined_call_operand.vmem [shape: f32[1,128], index: 3, kind: input, shape index: {}]
  %s4 = inlined_call_operand.vmem [shape: f32[128,128], index: 4, kind: output, shape index: {}]
  %s5 = sld [smem:[#allocation0]]
  $region34: #{emotional_graph_network.3} parent=0
    _
  %s7 = ssub.s32 1, %s5
  %s8 = scalar_select 0, %s7, %s5
  // Predicated region
  $region2: #{emotional_graph_network.3} parent=0 // pred_check
    _
  $region3: #{emotional_graph_network.3} parent=0 // pred_check_branch
    %10 = sbr.rel (0) target = $region5
  $region4: #{emotional_graph_network.3} parent=0 // pred_region
    _
  $region5: #{emotional_graph_network.3} parent=0 // pred_fallthru
    _
  // Predicated region
  $region6: #{emotional_graph_network.3} parent=0 // pred_check
    _
  $region7: #{emotional_graph_network.3} parent=0 // pred_check_branch
    %12 = sbr.rel (0) target = $region9
  $region8: #{emotional_graph_network.3} parent=0 // pred_region
    _
  $region9: #{emotional_graph_network.3} parent=0 // pred_fallthru
    _
  // Predicated region
  $region10: #{emotional_graph_network.3} parent=0 // pred_check
    _
  $region11: #{emotional_graph_network.3} parent=0 // pred_check_branch
    %14 = sbr.rel (0) target = $region13
  $region12: #{emotional_graph_network.3} parent=0 // pred_region
    _
  $region13: #{emotional_graph_network.3} parent=0 // pred_fallthru
    _
  // Predicated region
  $region14: #{emotional_graph_network.3} parent=0 // pred_check
    _
  $region15: #{emotional_graph_network.3} parent=0 // pred_check_branch
    %16 = sbr.rel (0) target = $region17
  $region16: #{emotional_graph_network.3} parent=0 // pred_region
    _
  $region17: #{emotional_graph_network.3} parent=0 // pred_fallthru
    _
  %p18 = scmp.eq.s32.totalorder 0, 0
  // Predicated region
  $region18: #{emotional_graph_network.3} parent=0 // pred_check
    %p19 = pneg %p18
  $region19: #{emotional_graph_network.3} parent=0 // pred_check_branch
    %21 = sbr.rel (%p19) target = $region21
  $region20: #{emotional_graph_network.3} parent=0 // pred_region
    %22 = vst [vmem:[#allocation2] sm:$0xff] 0.0
    %23 = vst [vmem:[#allocation2 + $0x8] sm:$0xff] 0.0
    %24 = vst [vmem:[#allocation2 + $0x10] sm:$0xff] 0.0
    %25 = vst [vmem:[#allocation2 + $0x18] sm:$0xff] 0.0
    %26 = vst [vmem:[#allocation2 + $0x20] sm:$0xff] 0.0
    %27 = vst [vmem:[#allocation2 + $0x28] sm:$0xff] 0.0
    %28 = vst [vmem:[#allocation2 + $0x30] sm:$0xff] 0.0
    %29 = vst [vmem:[#allocation2 + $0x38] sm:$0xff] 0.0
    %30 = vst [vmem:[#allocation2 + $0x40] sm:$0xff] 0.0
    %31 = vst [vmem:[#allocation2 + $0x48] sm:$0xff] 0.0
    %32 = vst [vmem:[#allocation2 + $0x50] sm:$0xff] 0.0
    %33 = vst [vmem:[#allocation2 + $0x58] sm:$0xff] 0.0
    %34 = vst [vmem:[#allocation2 + $0x60] sm:$0xff] 0.0
    %35 = vst [vmem:[#allocation2 + $0x68] sm:$0xff] 0.0
    %36 = vst [vmem:[#allocation2 + $0x70] sm:$0xff] 0.0
    %37 = vst [vmem:[#allocation2 + $0x78] sm:$0xff] 0.0
  $region21: #{emotional_graph_network.3} parent=0 // pred_fallthru
    _
  %s38 = smul.u32 0, 128
  %v39 = vld [vmem:[#allocation2] sm:$0xff]
  %v40 = vld [vmem:[#allocation2 + $0x8] sm:$0xff]
  %v41 = vld [vmem:[#allocation2 + $0x10] sm:$0xff]
  %v42 = vld [vmem:[#allocation2 + $0x18] sm:$0xff]
  %v43 = vld [vmem:[#allocation2 + $0x20] sm:$0xff]
  %v44 = vld [vmem:[#allocation2 + $0x28] sm:$0xff]
  %v45 = vld [vmem:[#allocation2 + $0x30] sm:$0xff]
  %v46 = vld [vmem:[#allocation2 + $0x38] sm:$0xff]
  %v47 = vld [vmem:[#allocation2 + $0x40] sm:$0xff]
  %v48 = vld [vmem:[#allocation2 + $0x48] sm:$0xff]
  %v49 = vld [vmem:[#allocation2 + $0x50] sm:$0xff]
  %v50 = vld [vmem:[#allocation2 + $0x58] sm:$0xff]
  %v51 = vld [vmem:[#allocation2 + $0x60] sm:$0xff]
  %v52 = vld [vmem:[#allocation2 + $0x68] sm:$0xff]
  %v53 = vld [vmem:[#allocation2 + $0x70] sm:$0xff]
  %v54 = vld [vmem:[#allocation2 + $0x78] sm:$0xff]
  %v55 = vld [vmem:[%s0] sm:$0xf]
  %v56 = vld [vmem:[%s0 + $0x4] sm:$0xf]
  %v57 = vld [vmem:[%s0 + $0x8] sm:$0xf]
  %v58 = vld [vmem:[%s0 + $0xc] sm:$0xf]
  %v59 = vld [vmem:[%s0 + $0x10] sm:$0xf]
  %v60 = vld [vmem:[%s0 + $0x14] sm:$0xf]
  %v61 = vld [vmem:[%s0 + $0x18] sm:$0xf]
  %v62 = vld [vmem:[%s0 + $0x1c] sm:$0xf]
  %v63 = vld [vmem:[%s0 + $0x20] sm:$0xf]
  %v64 = vld [vmem:[%s0 + $0x24] sm:$0xf]
  %v65 = vld [vmem:[%s0 + $0x28] sm:$0xf]
  %v66 = vld [vmem:[%s0 + $0x2c] sm:$0xf]
  %v67 = vld [vmem:[%s0 + $0x30] sm:$0xf]
  %v68 = vld [vmem:[%s0 + $0x34] sm:$0xf]
  %v69 = vld [vmem:[%s0 + $0x38] sm:$0xf]
  %v70 = vld [vmem:[%s0 + $0x3c] sm:$0xf]
  %s71 = sshra.s32 %s38, 3
  %s72 = sand.u32 %s38, 7
  %s73 = smul.addr %s71, 4
  %s74 = scalar_lea.vmem %s1, %s73
  %v75 = vld [vmem:[%s74] sm:$0xf]
  %v76 = vld [vmem:[%s74 + $0x4] sm:$0xf]
  %v77 = vld [vmem:[%s74 + $0x8] sm:$0xf]
  %v78 = vld [vmem:[%s74 + $0xc] sm:$0xf]
  %v79 = vld [vmem:[%s74 + $0x10] sm:$0xf]
  %v80 = vld [vmem:[%s74 + $0x14] sm:$0xf]
  %v81 = vld [vmem:[%s74 + $0x18] sm:$0xf]
  %v82 = vld [vmem:[%s74 + $0x1c] sm:$0xf]
  %v83 = vld [vmem:[%s74 + $0x20] sm:$0xf]
  %v84 = vld [vmem:[%s74 + $0x24] sm:$0xf]
  %v85 = vld [vmem:[%s74 + $0x28] sm:$0xf]
  %v86 = vld [vmem:[%s74 + $0x2c] sm:$0xf]
  %v87 = vld [vmem:[%s74 + $0x30] sm:$0xf]
  %v88 = vld [vmem:[%s74 + $0x34] sm:$0xf]
  %v89 = vld [vmem:[%s74 + $0x38] sm:$0xf]
  %v90 = vld [vmem:[%s74 + $0x3c] sm:$0xf]
  %v107 = vunpack.c.l.b16 %v55
  %v108 = vunpack.c.l.b16 %v56
  %v109 = vunpack.c.l.b16 %v57
  %v110 = vunpack.c.l.b16 %v58
  %v111 = vunpack.c.l.b16 %v59
  %v112 = vunpack.c.l.b16 %v60
  %v113 = vunpack.c.l.b16 %v61
  %v114 = vunpack.c.l.b16 %v62
  %v115 = vunpack.c.l.b16 %v63
  %v116 = vunpack.c.l.b16 %v64
  %v117 = vunpack.c.l.b16 %v65
  %v118 = vunpack.c.l.b16 %v66
  %v119 = vunpack.c.l.b16 %v67
  %v120 = vunpack.c.l.b16 %v68
  %v121 = vunpack.c.l.b16 %v69
  %v122 = vunpack.c.l.b16 %v70
  %v123 = vpack.c.b16 %v108, %v107
  %v124 = vpack.c.b16 %v110, %v109
  %v125 = vpack.c.b16 %v112, %v111
  %v126 = vpack.c.b16 %v114, %v113
  %v127 = vpack.c.b16 %v116, %v115
  %v128 = vpack.c.b16 %v118, %v117
  %v129 = vpack.c.b16 %v120, %v119
  %v130 = vpack.c.b16 %v122, %v121
  %v155 = vunpack.c.l.b16 %v75
  %v156 = vunpack.c.l.b16 %v76
  %v157 = vunpack.c.l.b16 %v77
  %v158 = vunpack.c.l.b16 %v78
  %v159 = vunpack.c.l.b16 %v79
  %v160 = vunpack.c.l.b16 %v80
  %v161 = vunpack.c.l.b16 %v81
  %v162 = vunpack.c.l.b16 %v82
  %v163 = vunpack.c.l.b16 %v83
  %v164 = vunpack.c.l.b16 %v84
  %v165 = vunpack.c.l.b16 %v85
  %v166 = vunpack.c.l.b16 %v86
  %v167 = vunpack.c.l.b16 %v87
  %v168 = vunpack.c.l.b16 %v88
  %v169 = vunpack.c.l.b16 %v89
  %v170 = vunpack.c.l.b16 %v90
  %v171 = vpack.c.b16 %v156, %v155
  %v172 = vpack.c.b16 %v158, %v157
  %v173 = vpack.c.b16 %v160, %v159
  %v174 = vpack.c.b16 %v162, %v161
  %v175 = vpack.c.b16 %v164, %v163
  %v176 = vpack.c.b16 %v166, %v165
  %v177 = vpack.c.b16 %v168, %v167
  %v178 = vpack.c.b16 %v170, %v169
  %187 = vmatprep.subr.bf16.mxu0 0
  %188 = vmatpush1.bf16.msra.mxu0 %v178
  %189 = vmatprep.subr.bf16.mxu0 0
  %190 = vmatpush1.bf16.msra.mxu0 %v177
  %191 = vmatprep.subr.bf16.mxu0 0
  %192 = vmatpush1.bf16.msra.mxu0 %v176
  %193 = vmatprep.subr.bf16.mxu0 0
  %194 = vmatpush1.bf16.msra.mxu0 %v175
  %195 = vmatprep.subr.bf16.mxu0 0
  %196 = vmatpush1.bf16.msra.mxu0 %v174
  %197 = vmatprep.subr.bf16.mxu0 0
  %198 = vmatpush1.bf16.msra.mxu0 %v173
  %199 = vmatprep.subr.bf16.mxu0 0
  %200 = vmatpush1.bf16.msra.mxu0 %v172
  %201 = vmatprep.subr.bf16.mxu0 0
  %202 = vmatpush1.bf16.msra.mxu0 %v171
  %203 = vmatprep.subr.bf16.mxu0 0
  %204 = vmatpush2.bf16.msra.mxu0 0
  %205 = vmatprep.subr.bf16.mxu0 0
  %206 = vmatpush2.bf16.msra.mxu0 0
  %207 = vmatprep.subr.bf16.mxu0 0
  %208 = vmatpush2.bf16.msra.mxu0 0
  %209 = vmatprep.subr.bf16.mxu0 0
  %210 = vmatpush2.bf16.msra.mxu0 0
  %211 = vmatprep.subr.bf16.mxu0 0
  %212 = vmatpush2.bf16.msra.mxu0 0
  %213 = vmatprep.subr.bf16.mxu0 0
  %214 = vmatpush2.bf16.msra.mxu0 0
  %215 = vmatprep.subr.bf16.mxu0 0
  %216 = vmatpush2.bf16.msra.mxu0 0
  %217 = vmatprep.subr.bf16.mxu0 0
  %218 = vmatpush2.bf16.msra.mxu0 0
  %219 = vmatprep.mubr.bf16.mxu0 0
  %220 = vmatmul.mubr.bf16.gmra.mxu0 %v123
  %v221 = vpop.f32.mrf.mxu0
  %v222 = vadd.f32 0.0, %v221
  %v223 = vpop.f32.mrf.mxu0
  %v224 = vpop.f32.mrf.mxu0
  %v225 = vadd.f32 0.0, %v224
  %v226 = vpop.f32.mrf.mxu0
  %227 = vmatprep.mubr.bf16.mxu0 0
  %228 = vmatmul.mubr.bf16.gmra.mxu0 %v124
  %v229 = vpop.f32.mrf.mxu0
  %v230 = vadd.f32 0.0, %v229
  %v231 = vpop.f32.mrf.mxu0
  %v232 = vpop.f32.mrf.mxu0
  %v233 = vadd.f32 0.0, %v232
  %v234 = vpop.f32.mrf.mxu0
  %235 = vmatprep.mubr.bf16.mxu0 0
  %236 = vmatmul.mubr.bf16.gmra.mxu0 %v125
  %v237 = vpop.f32.mrf.mxu0
  %v238 = vadd.f32 0.0, %v237
  %v239 = vpop.f32.mrf.mxu0
  %v240 = vpop.f32.mrf.mxu0
  %v241 = vadd.f32 0.0, %v240
  %v242 = vpop.f32.mrf.mxu0
  %243 = vmatprep.mubr.bf16.mxu0 0
  %244 = vmatmul.mubr.bf16.gmra.mxu0 %v126
  %v245 = vpop.f32.mrf.mxu0
  %v246 = vadd.f32 0.0, %v245
  %v247 = vpop.f32.mrf.mxu0
  %v248 = vpop.f32.mrf.mxu0
  %v249 = vadd.f32 0.0, %v248
  %v250 = vpop.f32.mrf.mxu0
  %251 = vmatprep.mubr.bf16.mxu0 0
  %252 = vmatmul.mubr.bf16.gmra.mxu0 %v127
  %v253 = vpop.f32.mrf.mxu0
  %v254 = vadd.f32 0.0, %v253
  %v255 = vpop.f32.mrf.mxu0
  %v256 = vpop.f32.mrf.mxu0
  %v257 = vadd.f32 0.0, %v256
  %v258 = vpop.f32.mrf.mxu0
  %259 = vmatprep.mubr.bf16.mxu0 0
  %260 = vmatmul.mubr.bf16.gmra.mxu0 %v128
  %v261 = vpop.f32.mrf.mxu0
  %v262 = vadd.f32 0.0, %v261
  %v263 = vpop.f32.mrf.mxu0
  %v264 = vpop.f32.mrf.mxu0
  %v265 = vadd.f32 0.0, %v264
  %v266 = vpop.f32.mrf.mxu0
  %267 = vmatprep.mubr.bf16.mxu0 0
  %268 = vmatmul.mubr.bf16.gmra.mxu0 %v129
  %v269 = vpop.f32.mrf.mxu0
  %v270 = vadd.f32 0.0, %v269
  %v271 = vpop.f32.mrf.mxu0
  %v272 = vpop.f32.mrf.mxu0
  %v273 = vadd.f32 0.0, %v272
  %v274 = vpop.f32.mrf.mxu0
  %275 = vmatprep.mubr.bf16.mxu0 0
  %276 = vmatmul.mubr.bf16.gmra.mxu0 %v130
  %v277 = vpop.f32.mrf.mxu0
  %v278 = vadd.f32 0.0, %v277
  %v279 = vpop.f32.mrf.mxu0
  %v280 = vpop.f32.mrf.mxu0
  %v281 = vadd.f32 0.0, %v280
  %v282 = vpop.f32.mrf.mxu0
  %283 = vdwg.mxu0
  %v284 = vadd.f32 %v39, %v222
  %v285 = vadd.f32 %v40, %v225
  %v286 = vadd.f32 %v41, %v230
  %v287 = vadd.f32 %v42, %v233
  %v288 = vadd.f32 %v43, %v238
  %v289 = vadd.f32 %v44, %v241
  %v290 = vadd.f32 %v45, %v246
  %v291 = vadd.f32 %v46, %v249
  %v292 = vadd.f32 %v47, %v254
  %v293 = vadd.f32 %v48, %v257
  %v294 = vadd.f32 %v49, %v262
  %v295 = vadd.f32 %v50, %v265
  %v296 = vadd.f32 %v51, %v270
  %v297 = vadd.f32 %v52, %v273
  %v298 = vadd.f32 %v53, %v278
  %v299 = vadd.f32 %v54, %v281
  %300 = vst [vmem:[#allocation2] sm:$0xff] %v284
  %301 = vst [vmem:[#allocation2 + $0x8] sm:$0xff] %v285
  %302 = vst [vmem:[#allocation2 + $0x10] sm:$0xff] %v286
  %303 = vst [vmem:[#allocation2 + $0x18] sm:$0xff] %v287
  %304 = vst [vmem:[#allocation2 + $0x20] sm:$0xff] %v288
  %305 = vst [vmem:[#allocation2 + $0x28] sm:$0xff] %v289
  %306 = vst [vmem:[#allocation2 + $0x30] sm:$0xff] %v290
  %307 = vst [vmem:[#allocation2 + $0x38] sm:$0xff] %v291
  %308 = vst [vmem:[#allocation2 + $0x40] sm:$0xff] %v292
  %309 = vst [vmem:[#allocation2 + $0x48] sm:$0xff] %v293
  %310 = vst [vmem:[#allocation2 + $0x50] sm:$0xff] %v294
  %311 = vst [vmem:[#allocation2 + $0x58] sm:$0xff] %v295
  %312 = vst [vmem:[#allocation2 + $0x60] sm:$0xff] %v296
  %313 = vst [vmem:[#allocation2 + $0x68] sm:$0xff] %v297
  %314 = vst [vmem:[#allocation2 + $0x70] sm:$0xff] %v298
  %315 = vst [vmem:[#allocation2 + $0x78] sm:$0xff] %v299
  // Predicated region
  $region22: #{emotional_graph_network.3} parent=0 // pred_check
    %p316 = pneg %p18
  $region23: #{emotional_graph_network.3} parent=0 // pred_check_branch
    %318 = sbr.rel (%p316) target = $region25
  $region24: #{emotional_graph_network.3} parent=0 // pred_region
    %v319 = vld [vmem:[#allocation2] sm:$0xff]
    %v320 = vld [vmem:[#allocation2 + $0x8] sm:$0xff]
    %v321 = vld [vmem:[#allocation2 + $0x10] sm:$0xff]
    %v322 = vld [vmem:[#allocation2 + $0x18] sm:$0xff]
    %v323 = vld [vmem:[#allocation2 + $0x20] sm:$0xff]
    %v324 = vld [vmem:[#allocation2 + $0x28] sm:$0xff]
    %v325 = vld [vmem:[#allocation2 + $0x30] sm:$0xff]
    %v326 = vld [vmem:[#allocation2 + $0x38] sm:$0xff]
    %v327 = vld [vmem:[#allocation2 + $0x40] sm:$0xff]
    %v328 = vld [vmem:[#allocation2 + $0x48] sm:$0xff]
    %v329 = vld [vmem:[#allocation2 + $0x50] sm:$0xff]
    %v330 = vld [vmem:[#allocation2 + $0x58] sm:$0xff]
    %v331 = vld [vmem:[#allocation2 + $0x60] sm:$0xff]
    %v332 = vld [vmem:[#allocation2 + $0x68] sm:$0xff]
    %v333 = vld [vmem:[#allocation2 + $0x70] sm:$0xff]
    %v334 = vld [vmem:[#allocation2 + $0x78] sm:$0xff]
    %v335 = vpack.c.bf16 %v320, %v319
    %v336 = vpack.c.bf16 %v322, %v321
    %v337 = vpack.c.bf16 %v324, %v323
    %v338 = vpack.c.bf16 %v326, %v325
    %v339 = vpack.c.bf16 %v328, %v327
    %v340 = vpack.c.bf16 %v330, %v329
    %v341 = vpack.c.bf16 %v332, %v331
    %v342 = vpack.c.bf16 %v334, %v333
    %v343 = vld [vmem:[%s2] sm:$0xf]
    %v344 = vld [vmem:[%s2 + $0x4] sm:$0xf]
    %v345 = vld [vmem:[%s2 + $0x8] sm:$0xf]
    %v346 = vld [vmem:[%s2 + $0xc] sm:$0xf]
    %v347 = vld [vmem:[%s2 + $0x10] sm:$0xf]
    %v348 = vld [vmem:[%s2 + $0x14] sm:$0xf]
    %v349 = vld [vmem:[%s2 + $0x18] sm:$0xf]
    %v350 = vld [vmem:[%s2 + $0x1c] sm:$0xf]
    %v351 = vld [vmem:[%s2 + $0x20] sm:$0xf]
    %v352 = vld [vmem:[%s2 + $0x24] sm:$0xf]
    %v353 = vld [vmem:[%s2 + $0x28] sm:$0xf]
    %v354 = vld [vmem:[%s2 + $0x2c] sm:$0xf]
    %v355 = vld [vmem:[%s2 + $0x30] sm:$0xf]
    %v356 = vld [vmem:[%s2 + $0x34] sm:$0xf]
    %v357 = vld [vmem:[%s2 + $0x38] sm:$0xf]
    %v358 = vld [vmem:[%s2 + $0x3c] sm:$0xf]
    %v359 = vld [vmem:[%s3] sm:$0x1]
    %v361 = vlaneseq
    %v362 = vshrl.u32 %v361, 7
    %v363 = vsub.s32 0, %v362
    %v364 = vrot.slane %v359, %v363
    %v382 = vunpack.c.l.b16 %v343
    %v383 = vunpack.c.l.b16 %v344
    %v384 = vunpack.c.l.b16 %v345
    %v385 = vunpack.c.l.b16 %v346
    %v386 = vunpack.c.l.b16 %v347
    %v387 = vunpack.c.l.b16 %v348
    %v388 = vunpack.c.l.b16 %v349
    %v389 = vunpack.c.l.b16 %v350
    %v390 = vunpack.c.l.b16 %v351
    %v391 = vunpack.c.l.b16 %v352
    %v392 = vunpack.c.l.b16 %v353
    %v393 = vunpack.c.l.b16 %v354
    %v394 = vunpack.c.l.b16 %v355
    %v395 = vunpack.c.l.b16 %v356
    %v396 = vunpack.c.l.b16 %v357
    %v397 = vunpack.c.l.b16 %v358
    %v398 = vpack.c.b16 %v383, %v382
    %v399 = vpack.c.b16 %v385, %v384
    %v400 = vpack.c.b16 %v387, %v386
    %v401 = vpack.c.b16 %v389, %v388
    %v402 = vpack.c.b16 %v391, %v390
    %v403 = vpack.c.b16 %v393, %v392
    %v404 = vpack.c.b16 %v395, %v394
    %v405 = vpack.c.b16 %v397, %v396
    %414 = vmatprep.subr.bf16.mxu0 0
    %415 = vmatpush1.bf16.msra.mxu0 %v405
    %416 = vmatprep.subr.bf16.mxu0 0
    %417 = vmatpush1.bf16.msra.mxu0 %v404
    %418 = vmatprep.subr.bf16.mxu0 0
    %419 = vmatpush1.bf16.msra.mxu0 %v403
    %420 = vmatprep.subr.bf16.mxu0 0
    %421 = vmatpush1.bf16.msra.mxu0 %v402
    %422 = vmatprep.subr.bf16.mxu0 0
    %423 = vmatpush1.bf16.msra.mxu0 %v401
    %424 = vmatprep.subr.bf16.mxu0 0
    %425 = vmatpush1.bf16.msra.mxu0 %v400
    %426 = vmatprep.subr.bf16.mxu0 0
    %427 = vmatpush1.bf16.msra.mxu0 %v399
    %428 = vmatprep.subr.bf16.mxu0 0
    %429 = vmatpush1.bf16.msra.mxu0 %v398
    %430 = vmatprep.subr.bf16.mxu0 0
    %431 = vmatpush2.bf16.msra.mxu0 0
    %432 = vmatprep.subr.bf16.mxu0 0
    %433 = vmatpush2.bf16.msra.mxu0 0
    %434 = vmatprep.subr.bf16.mxu0 0
    %435 = vmatpush2.bf16.msra.mxu0 0
    %436 = vmatprep.subr.bf16.mxu0 0
    %437 = vmatpush2.bf16.msra.mxu0 0
    %438 = vmatprep.subr.bf16.mxu0 0
    %439 = vmatpush2.bf16.msra.mxu0 0
    %440 = vmatprep.subr.bf16.mxu0 0
    %441 = vmatpush2.bf16.msra.mxu0 0
    %442 = vmatprep.subr.bf16.mxu0 0
    %443 = vmatpush2.bf16.msra.mxu0 0
    %444 = vmatprep.subr.bf16.mxu0 0
    %445 = vmatpush2.bf16.msra.mxu0 0
    %446 = vmatprep.mubr.bf16.mxu0 0
    %447 = vmatmul.mubr.bf16.gmra.mxu0 %v335
    %v448 = vpop.f32.mrf.mxu0
    %v449 = vadd.f32 %v364, %v448
    %v450 = vpop.f32.mrf.mxu0
    %v451 = vpop.f32.mrf.mxu0
    %v452 = vadd.f32 %v364, %v451
    %v453 = vpop.f32.mrf.mxu0
    %454 = vmatprep.mubr.bf16.mxu0 0
    %455 = vmatmul.mubr.bf16.gmra.mxu0 %v336
    %v456 = vpop.f32.mrf.mxu0
    %v457 = vadd.f32 %v364, %v456
    %v458 = vpop.f32.mrf.mxu0
    %v459 = vpop.f32.mrf.mxu0
    %v460 = vadd.f32 %v364, %v459
    %v461 = vpop.f32.mrf.mxu0
    %462 = vmatprep.mubr.bf16.mxu0 0
    %463 = vmatmul.mubr.bf16.gmra.mxu0 %v337
    %v464 = vpop.f32.mrf.mxu0
    %v465 = vadd.f32 %v364, %v464
    %v466 = vpop.f32.mrf.mxu0
    %v467 = vpop.f32.mrf.mxu0
    %v468 = vadd.f32 %v364, %v467
    %v469 = vpop.f32.mrf.mxu0
    %470 = vmatprep.mubr.bf16.mxu0 0
    %471 = vmatmul.mubr.bf16.gmra.mxu0 %v338
    %v472 = vpop.f32.mrf.mxu0
    %v473 = vadd.f32 %v364, %v472
    %v474 = vpop.f32.mrf.mxu0
    %v475 = vpop.f32.mrf.mxu0
    %v476 = vadd.f32 %v364, %v475
    %v477 = vpop.f32.mrf.mxu0
    %478 = vmatprep.mubr.bf16.mxu0 0
    %479 = vmatmul.mubr.bf16.gmra.mxu0 %v339
    %v480 = vpop.f32.mrf.mxu0
    %v481 = vadd.f32 %v364, %v480
    %v482 = vpop.f32.mrf.mxu0
    %v483 = vpop.f32.mrf.mxu0
    %v484 = vadd.f32 %v364, %v483
    %v485 = vpop.f32.mrf.mxu0
    %486 = vmatprep.mubr.bf16.mxu0 0
    %487 = vmatmul.mubr.bf16.gmra.mxu0 %v340
    %v488 = vpop.f32.mrf.mxu0
    %v489 = vadd.f32 %v364, %v488
    %v490 = vpop.f32.mrf.mxu0
    %v491 = vpop.f32.mrf.mxu0
    %v492 = vadd.f32 %v364, %v491
    %v493 = vpop.f32.mrf.mxu0
    %494 = vmatprep.mubr.bf16.mxu0 0
    %495 = vmatmul.mubr.bf16.gmra.mxu0 %v341
    %v496 = vpop.f32.mrf.mxu0
    %v497 = vadd.f32 %v364, %v496
    %v498 = vpop.f32.mrf.mxu0
    %v499 = vpop.f32.mrf.mxu0
    %v500 = vadd.f32 %v364, %v499
    %v501 = vpop.f32.mrf.mxu0
    %502 = vmatprep.mubr.bf16.mxu0 0
    %503 = vmatmul.mubr.bf16.gmra.mxu0 %v342
    %v504 = vpop.f32.mrf.mxu0
    %v505 = vadd.f32 %v364, %v504
    %v506 = vpop.f32.mrf.mxu0
    %v507 = vpop.f32.mrf.mxu0
    %v508 = vadd.f32 %v364, %v507
    %v509 = vpop.f32.mrf.mxu0
    %510 = vdwg.mxu0
    %511 = vst [vmem:[%s4] sm:$0xff] %v449
    %512 = vst [vmem:[%s4 + $0x8] sm:$0xff] %v452
    %513 = vst [vmem:[%s4 + $0x10] sm:$0xff] %v457
    %514 = vst [vmem:[%s4 + $0x18] sm:$0xff] %v460
    %515 = vst [vmem:[%s4 + $0x20] sm:$0xff] %v465
    %516 = vst [vmem:[%s4 + $0x28] sm:$0xff] %v468
    %517 = vst [vmem:[%s4 + $0x30] sm:$0xff] %v473
    %518 = vst [vmem:[%s4 + $0x38] sm:$0xff] %v476
    %519 = vst [vmem:[%s4 + $0x40] sm:$0xff] %v481
    %520 = vst [vmem:[%s4 + $0x48] sm:$0xff] %v484
    %521 = vst [vmem:[%s4 + $0x50] sm:$0xff] %v489
    %522 = vst [vmem:[%s4 + $0x58] sm:$0xff] %v492
    %523 = vst [vmem:[%s4 + $0x60] sm:$0xff] %v497
    %524 = vst [vmem:[%s4 + $0x68] sm:$0xff] %v500
    %525 = vst [vmem:[%s4 + $0x70] sm:$0xff] %v505
    %526 = vst [vmem:[%s4 + $0x78] sm:$0xff] %v508
  $region25: #{emotional_graph_network.3} parent=0 // pred_fallthru
    _
  // Predicated region
  $region26: #{emotional_graph_network.3} parent=0 // pred_check
    _
  $region27: #{emotional_graph_network.3} parent=0 // pred_check_branch
    %528 = sbr.rel (0) target = $region29
  $region28: #{emotional_graph_network.3} parent=0 // pred_region
    _
  $region29: #{emotional_graph_network.3} parent=0 // pred_fallthru
    _
  // Predicated region
  $region30: #{emotional_graph_network.3} parent=0 // pred_check
    _
  $region31: #{emotional_graph_network.3} parent=0 // pred_check_branch
    %530 = sbr.rel (0) target = $region33
  $region32: #{emotional_graph_network.3} parent=0 // pred_region
    _
  $region33: #{emotional_graph_network.3} parent=0 // pred_fallthru
    _

// kernel: emotional_graph_network.2
$region0: #{emotional_graph_network.2}
  #allocation0 [shape = 'u32[]', space=smem, size = 0x4, offset = 0x4, fixed_abs, tag = 'smem constant byte address 0x4 - core index']
  #allocation1 [shape = 'u32[144,128]{1,0:T(1,128)}', space=vmem, size = 0x12000, scoped, tag = 'internal scratch']
  #allocation2 [shape = 'f32[128,128]{1,0:T(8,128)}', space=vmem, size = 0x10000, scoped, tag = 'scratch operand']
  %s0 = inlined_call_operand.vmem [shape: bf16[128,128], index: 0, kind: input, shape index: {}]
  %s1 = inlined_call_operand.vmem [shape: bf16[128,128], index: 1, kind: input, shape index: {}]
  %s2 = inlined_call_operand.vmem [shape: f32[1,128], index: 2, kind: input, shape index: {}]
  %s3 = inlined_call_operand.vmem [shape: bf16[128,128], index: 3, kind: output, shape index: {}]
  %s4 = sld [smem:[#allocation0]]
  $region30: #{emotional_graph_network.2} parent=0
    _
  %s6 = ssub.s32 1, %s4
  %s7 = scalar_select 0, %s6, %s4
  // Predicated region
  $region2: #{emotional_graph_network.2} parent=0 // pred_check
    _
  $region3: #{emotional_graph_network.2} parent=0 // pred_check_branch
    %9 = sbr.rel (0) target = $region5
  $region4: #{emotional_graph_network.2} parent=0 // pred_region
    _
  $region5: #{emotional_graph_network.2} parent=0 // pred_fallthru
    _
  // Predicated region
  $region6: #{emotional_graph_network.2} parent=0 // pred_check
    _
  $region7: #{emotional_graph_network.2} parent=0 // pred_check_branch
    %11 = sbr.rel (0) target = $region9
  $region8: #{emotional_graph_network.2} parent=0 // pred_region
    _
  $region9: #{emotional_graph_network.2} parent=0 // pred_fallthru
    _
  // Predicated region
  $region10: #{emotional_graph_network.2} parent=0 // pred_check
    _
  $region11: #{emotional_graph_network.2} parent=0 // pred_check_branch
    %13 = sbr.rel (0) target = $region13
  $region12: #{emotional_graph_network.2} parent=0 // pred_region
    _
  $region13: #{emotional_graph_network.2} parent=0 // pred_fallthru
    _
  %p15 = scmp.eq.s32.totalorder 0, 0
  // Predicated region
  $region14: #{emotional_graph_network.2} parent=0 // pred_check
    %p16 = pneg %p15
  $region15: #{emotional_graph_network.2} parent=0 // pred_check_branch
    %18 = sbr.rel (%p16) target = $region17
  $region16: #{emotional_graph_network.2} parent=0 // pred_region
    %19 = vst [vmem:[#allocation2] sm:$0xff] 0.0
    %20 = vst [vmem:[#allocation2 + $0x8] sm:$0xff] 0.0
    %21 = vst [vmem:[#allocation2 + $0x10] sm:$0xff] 0.0
    %22 = vst [vmem:[#allocation2 + $0x18] sm:$0xff] 0.0
    %23 = vst [vmem:[#allocation2 + $0x20] sm:$0xff] 0.0
    %24 = vst [vmem:[#allocation2 + $0x28] sm:$0xff] 0.0
    %25 = vst [vmem:[#allocation2 + $0x30] sm:$0xff] 0.0
    %26 = vst [vmem:[#allocation2 + $0x38] sm:$0xff] 0.0
    %27 = vst [vmem:[#allocation2 + $0x40] sm:$0xff] 0.0
    %28 = vst [vmem:[#allocation2 + $0x48] sm:$0xff] 0.0
    %29 = vst [vmem:[#allocation2 + $0x50] sm:$0xff] 0.0
    %30 = vst [vmem:[#allocation2 + $0x58] sm:$0xff] 0.0
    %31 = vst [vmem:[#allocation2 + $0x60] sm:$0xff] 0.0
    %32 = vst [vmem:[#allocation2 + $0x68] sm:$0xff] 0.0
    %33 = vst [vmem:[#allocation2 + $0x70] sm:$0xff] 0.0
    %34 = vst [vmem:[#allocation2 + $0x78] sm:$0xff] 0.0
  $region17: #{emotional_graph_network.2} parent=0 // pred_fallthru
    _
  %s35 = smul.u32 0, 128
  %v36 = vld [vmem:[#allocation2] sm:$0xff]
  %v37 = vld [vmem:[#allocation2 + $0x8] sm:$0xff]
  %v38 = vld [vmem:[#allocation2 + $0x10] sm:$0xff]
  %v39 = vld [vmem:[#allocation2 + $0x18] sm:$0xff]
  %v40 = vld [vmem:[#allocation2 + $0x20] sm:$0xff]
  %v41 = vld [vmem:[#allocation2 + $0x28] sm:$0xff]
  %v42 = vld [vmem:[#allocation2 + $0x30] sm:$0xff]
  %v43 = vld [vmem:[#allocation2 + $0x38] sm:$0xff]
  %v44 = vld [vmem:[#allocation2 + $0x40] sm:$0xff]
  %v45 = vld [vmem:[#allocation2 + $0x48] sm:$0xff]
  %v46 = vld [vmem:[#allocation2 + $0x50] sm:$0xff]
  %v47 = vld [vmem:[#allocation2 + $0x58] sm:$0xff]
  %v48 = vld [vmem:[#allocation2 + $0x60] sm:$0xff]
  %v49 = vld [vmem:[#allocation2 + $0x68] sm:$0xff]
  %v50 = vld [vmem:[#allocation2 + $0x70] sm:$0xff]
  %v51 = vld [vmem:[#allocation2 + $0x78] sm:$0xff]
  %v52 = vld [vmem:[%s0] sm:$0xf]
  %v53 = vld [vmem:[%s0 + $0x4] sm:$0xf]
  %v54 = vld [vmem:[%s0 + $0x8] sm:$0xf]
  %v55 = vld [vmem:[%s0 + $0xc] sm:$0xf]
  %v56 = vld [vmem:[%s0 + $0x10] sm:$0xf]
  %v57 = vld [vmem:[%s0 + $0x14] sm:$0xf]
  %v58 = vld [vmem:[%s0 + $0x18] sm:$0xf]
  %v59 = vld [vmem:[%s0 + $0x1c] sm:$0xf]
  %v60 = vld [vmem:[%s0 + $0x20] sm:$0xf]
  %v61 = vld [vmem:[%s0 + $0x24] sm:$0xf]
  %v62 = vld [vmem:[%s0 + $0x28] sm:$0xf]
  %v63 = vld [vmem:[%s0 + $0x2c] sm:$0xf]
  %v64 = vld [vmem:[%s0 + $0x30] sm:$0xf]
  %v65 = vld [vmem:[%s0 + $0x34] sm:$0xf]
  %v66 = vld [vmem:[%s0 + $0x38] sm:$0xf]
  %v67 = vld [vmem:[%s0 + $0x3c] sm:$0xf]
  %s68 = sshra.s32 %s35, 3
  %s69 = sand.u32 %s35, 7
  %s70 = smul.addr %s68, 4
  %s71 = scalar_lea.vmem %s1, %s70
  %v72 = vld [vmem:[%s71] sm:$0xf]
  %v73 = vld [vmem:[%s71 + $0x4] sm:$0xf]
  %v74 = vld [vmem:[%s71 + $0x8] sm:$0xf]
  %v75 = vld [vmem:[%s71 + $0xc] sm:$0xf]
  %v76 = vld [vmem:[%s71 + $0x10] sm:$0xf]
  %v77 = vld [vmem:[%s71 + $0x14] sm:$0xf]
  %v78 = vld [vmem:[%s71 + $0x18] sm:$0xf]
  %v79 = vld [vmem:[%s71 + $0x1c] sm:$0xf]
  %v80 = vld [vmem:[%s71 + $0x20] sm:$0xf]
  %v81 = vld [vmem:[%s71 + $0x24] sm:$0xf]
  %v82 = vld [vmem:[%s71 + $0x28] sm:$0xf]
  %v83 = vld [vmem:[%s71 + $0x2c] sm:$0xf]
  %v84 = vld [vmem:[%s71 + $0x30] sm:$0xf]
  %v85 = vld [vmem:[%s71 + $0x34] sm:$0xf]
  %v86 = vld [vmem:[%s71 + $0x38] sm:$0xf]
  %v87 = vld [vmem:[%s71 + $0x3c] sm:$0xf]
  %v104 = vunpack.c.l.b16 %v52
  %v105 = vunpack.c.l.b16 %v53
  %v106 = vunpack.c.l.b16 %v54
  %v107 = vunpack.c.l.b16 %v55
  %v108 = vunpack.c.l.b16 %v56
  %v109 = vunpack.c.l.b16 %v57
  %v110 = vunpack.c.l.b16 %v58
  %v111 = vunpack.c.l.b16 %v59
  %v112 = vunpack.c.l.b16 %v60
  %v113 = vunpack.c.l.b16 %v61
  %v114 = vunpack.c.l.b16 %v62
  %v115 = vunpack.c.l.b16 %v63
  %v116 = vunpack.c.l.b16 %v64
  %v117 = vunpack.c.l.b16 %v65
  %v118 = vunpack.c.l.b16 %v66
  %v119 = vunpack.c.l.b16 %v67
  %v120 = vpack.c.b16 %v105, %v104
  %v121 = vpack.c.b16 %v107, %v106
  %v122 = vpack.c.b16 %v109, %v108
  %v123 = vpack.c.b16 %v111, %v110
  %v124 = vpack.c.b16 %v113, %v112
  %v125 = vpack.c.b16 %v115, %v114
  %v126 = vpack.c.b16 %v117, %v116
  %v127 = vpack.c.b16 %v119, %v118
  %v152 = vunpack.c.l.b16 %v72
  %v153 = vunpack.c.l.b16 %v73
  %v154 = vunpack.c.l.b16 %v74
  %v155 = vunpack.c.l.b16 %v75
  %v156 = vunpack.c.l.b16 %v76
  %v157 = vunpack.c.l.b16 %v77
  %v158 = vunpack.c.l.b16 %v78
  %v159 = vunpack.c.l.b16 %v79
  %v160 = vunpack.c.l.b16 %v80
  %v161 = vunpack.c.l.b16 %v81
  %v162 = vunpack.c.l.b16 %v82
  %v163 = vunpack.c.l.b16 %v83
  %v164 = vunpack.c.l.b16 %v84
  %v165 = vunpack.c.l.b16 %v85
  %v166 = vunpack.c.l.b16 %v86
  %v167 = vunpack.c.l.b16 %v87
  %v168 = vpack.c.b16 %v153, %v152
  %v169 = vpack.c.b16 %v155, %v154
  %v170 = vpack.c.b16 %v157, %v156
  %v171 = vpack.c.b16 %v159, %v158
  %v172 = vpack.c.b16 %v161, %v160
  %v173 = vpack.c.b16 %v163, %v162
  %v174 = vpack.c.b16 %v165, %v164
  %v175 = vpack.c.b16 %v167, %v166
  %184 = vmatprep.subr.bf16.mxu0 0
  %185 = vmatpush1.bf16.msra.mxu0 %v175
  %186 = vmatprep.subr.bf16.mxu0 0
  %187 = vmatpush1.bf16.msra.mxu0 %v174
  %188 = vmatprep.subr.bf16.mxu0 0
  %189 = vmatpush1.bf16.msra.mxu0 %v173
  %190 = vmatprep.subr.bf16.mxu0 0
  %191 = vmatpush1.bf16.msra.mxu0 %v172
  %192 = vmatprep.subr.bf16.mxu0 0
  %193 = vmatpush1.bf16.msra.mxu0 %v171
  %194 = vmatprep.subr.bf16.mxu0 0
  %195 = vmatpush1.bf16.msra.mxu0 %v170
  %196 = vmatprep.subr.bf16.mxu0 0
  %197 = vmatpush1.bf16.msra.mxu0 %v169
  %198 = vmatprep.subr.bf16.mxu0 0
  %199 = vmatpush1.bf16.msra.mxu0 %v168
  %200 = vmatprep.subr.bf16.mxu0 0
  %201 = vmatpush2.bf16.msra.mxu0 0
  %202 = vmatprep.subr.bf16.mxu0 0
  %203 = vmatpush2.bf16.msra.mxu0 0
  %204 = vmatprep.subr.bf16.mxu0 0
  %205 = vmatpush2.bf16.msra.mxu0 0
  %206 = vmatprep.subr.bf16.mxu0 0
  %207 = vmatpush2.bf16.msra.mxu0 0
  %208 = vmatprep.subr.bf16.mxu0 0
  %209 = vmatpush2.bf16.msra.mxu0 0
  %210 = vmatprep.subr.bf16.mxu0 0
  %211 = vmatpush2.bf16.msra.mxu0 0
  %212 = vmatprep.subr.bf16.mxu0 0
  %213 = vmatpush2.bf16.msra.mxu0 0
  %214 = vmatprep.subr.bf16.mxu0 0
  %215 = vmatpush2.bf16.msra.mxu0 0
  %216 = vmatprep.mubr.bf16.mxu0 0
  %217 = vmatmul.mubr.bf16.gmra.mxu0 %v120
  %v218 = vpop.f32.mrf.mxu0
  %v219 = vadd.f32 0.0, %v218
  %v220 = vpop.f32.mrf.mxu0
  %v221 = vpop.f32.mrf.mxu0
  %v222 = vadd.f32 0.0, %v221
  %v223 = vpop.f32.mrf.mxu0
  %224 = vmatprep.mubr.bf16.mxu0 0
  %225 = vmatmul.mubr.bf16.gmra.mxu0 %v121
  %v226 = vpop.f32.mrf.mxu0
  %v227 = vadd.f32 0.0, %v226
  %v228 = vpop.f32.mrf.mxu0
  %v229 = vpop.f32.mrf.mxu0
  %v230 = vadd.f32 0.0, %v229
  %v231 = vpop.f32.mrf.mxu0
  %232 = vmatprep.mubr.bf16.mxu0 0
  %233 = vmatmul.mubr.bf16.gmra.mxu0 %v122
  %v234 = vpop.f32.mrf.mxu0
  %v235 = vadd.f32 0.0, %v234
  %v236 = vpop.f32.mrf.mxu0
  %v237 = vpop.f32.mrf.mxu0
  %v238 = vadd.f32 0.0, %v237
  %v239 = vpop.f32.mrf.mxu0
  %240 = vmatprep.mubr.bf16.mxu0 0
  %241 = vmatmul.mubr.bf16.gmra.mxu0 %v123
  %v242 = vpop.f32.mrf.mxu0
  %v243 = vadd.f32 0.0, %v242
  %v244 = vpop.f32.mrf.mxu0
  %v245 = vpop.f32.mrf.mxu0
  %v246 = vadd.f32 0.0, %v245
  %v247 = vpop.f32.mrf.mxu0
  %248 = vmatprep.mubr.bf16.mxu0 0
  %249 = vmatmul.mubr.bf16.gmra.mxu0 %v124
  %v250 = vpop.f32.mrf.mxu0
  %v251 = vadd.f32 0.0, %v250
  %v252 = vpop.f32.mrf.mxu0
  %v253 = vpop.f32.mrf.mxu0
  %v254 = vadd.f32 0.0, %v253
  %v255 = vpop.f32.mrf.mxu0
  %256 = vmatprep.mubr.bf16.mxu0 0
  %257 = vmatmul.mubr.bf16.gmra.mxu0 %v125
  %v258 = vpop.f32.mrf.mxu0
  %v259 = vadd.f32 0.0, %v258
  %v260 = vpop.f32.mrf.mxu0
  %v261 = vpop.f32.mrf.mxu0
  %v262 = vadd.f32 0.0, %v261
  %v263 = vpop.f32.mrf.mxu0
  %264 = vmatprep.mubr.bf16.mxu0 0
  %265 = vmatmul.mubr.bf16.gmra.mxu0 %v126
  %v266 = vpop.f32.mrf.mxu0
  %v267 = vadd.f32 0.0, %v266
  %v268 = vpop.f32.mrf.mxu0
  %v269 = vpop.f32.mrf.mxu0
  %v270 = vadd.f32 0.0, %v269
  %v271 = vpop.f32.mrf.mxu0
  %272 = vmatprep.mubr.bf16.mxu0 0
  %273 = vmatmul.mubr.bf16.gmra.mxu0 %v127
  %v274 = vpop.f32.mrf.mxu0
  %v275 = vadd.f32 0.0, %v274
  %v276 = vpop.f32.mrf.mxu0
  %v277 = vpop.f32.mrf.mxu0
  %v278 = vadd.f32 0.0, %v277
  %v279 = vpop.f32.mrf.mxu0
  %280 = vdwg.mxu0
  %v281 = vadd.f32 %v36, %v219
  %v282 = vadd.f32 %v37, %v222
  %v283 = vadd.f32 %v38, %v227
  %v284 = vadd.f32 %v39, %v230
  %v285 = vadd.f32 %v40, %v235
  %v286 = vadd.f32 %v41, %v238
  %v287 = vadd.f32 %v42, %v243
  %v288 = vadd.f32 %v43, %v246
  %v289 = vadd.f32 %v44, %v251
  %v290 = vadd.f32 %v45, %v254
  %v291 = vadd.f32 %v46, %v259
  %v292 = vadd.f32 %v47, %v262
  %v293 = vadd.f32 %v48, %v267
  %v294 = vadd.f32 %v49, %v270
  %v295 = vadd.f32 %v50, %v275
  %v296 = vadd.f32 %v51, %v278
  %297 = vst [vmem:[#allocation2] sm:$0xff] %v281
  %298 = vst [vmem:[#allocation2 + $0x8] sm:$0xff] %v282
  %299 = vst [vmem:[#allocation2 + $0x10] sm:$0xff] %v283
  %300 = vst [vmem:[#allocation2 + $0x18] sm:$0xff] %v284
  %301 = vst [vmem:[#allocation2 + $0x20] sm:$0xff] %v285
  %302 = vst [vmem:[#allocation2 + $0x28] sm:$0xff] %v286
  %303 = vst [vmem:[#allocation2 + $0x30] sm:$0xff] %v287
  %304 = vst [vmem:[#allocation2 + $0x38] sm:$0xff] %v288
  %305 = vst [vmem:[#allocation2 + $0x40] sm:$0xff] %v289
  %306 = vst [vmem:[#allocation2 + $0x48] sm:$0xff] %v290
  %307 = vst [vmem:[#allocation2 + $0x50] sm:$0xff] %v291
  %308 = vst [vmem:[#allocation2 + $0x58] sm:$0xff] %v292
  %309 = vst [vmem:[#allocation2 + $0x60] sm:$0xff] %v293
  %310 = vst [vmem:[#allocation2 + $0x68] sm:$0xff] %v294
  %311 = vst [vmem:[#allocation2 + $0x70] sm:$0xff] %v295
  %312 = vst [vmem:[#allocation2 + $0x78] sm:$0xff] %v296
  // Predicated region
  $region18: #{emotional_graph_network.2} parent=0 // pred_check
    %p313 = pneg %p15
  $region19: #{emotional_graph_network.2} parent=0 // pred_check_branch
    %315 = sbr.rel (%p313) target = $region21
  $region20: #{emotional_graph_network.2} parent=0 // pred_region
    %v316 = vld [vmem:[#allocation2] sm:$0xff]
    %v317 = vld [vmem:[#allocation2 + $0x8] sm:$0xff]
    %v318 = vld [vmem:[#allocation2 + $0x10] sm:$0xff]
    %v319 = vld [vmem:[#allocation2 + $0x18] sm:$0xff]
    %v320 = vld [vmem:[#allocation2 + $0x20] sm:$0xff]
    %v321 = vld [vmem:[#allocation2 + $0x28] sm:$0xff]
    %v322 = vld [vmem:[#allocation2 + $0x30] sm:$0xff]
    %v323 = vld [vmem:[#allocation2 + $0x38] sm:$0xff]
    %v324 = vld [vmem:[#allocation2 + $0x40] sm:$0xff]
    %v325 = vld [vmem:[#allocation2 + $0x48] sm:$0xff]
    %v326 = vld [vmem:[#allocation2 + $0x50] sm:$0xff]
    %v327 = vld [vmem:[#allocation2 + $0x58] sm:$0xff]
    %v328 = vld [vmem:[#allocation2 + $0x60] sm:$0xff]
    %v329 = vld [vmem:[#allocation2 + $0x68] sm:$0xff]
    %v330 = vld [vmem:[#allocation2 + $0x70] sm:$0xff]
    %v331 = vld [vmem:[#allocation2 + $0x78] sm:$0xff]
    %v332 = vld [vmem:[%s2] sm:$0x1]
    %v334 = vlaneseq
    %v335 = vshrl.u32 %v334, 7
    %v336 = vsub.s32 0, %v335
    %v337 = vrot.slane %v332, %v336
    %v339 = vadd.f32 %v316, %v337
    %v340 = vadd.f32 %v317, %v337
    %v341 = vadd.f32 %v318, %v337
    %v342 = vadd.f32 %v319, %v337
    %v343 = vadd.f32 %v320, %v337
    %v344 = vadd.f32 %v321, %v337
    %v345 = vadd.f32 %v322, %v337
    %v346 = vadd.f32 %v323, %v337
    %v347 = vadd.f32 %v324, %v337
    %v348 = vadd.f32 %v325, %v337
    %v349 = vadd.f32 %v326, %v337
    %v350 = vadd.f32 %v327, %v337
    %v351 = vadd.f32 %v328, %v337
    %v352 = vadd.f32 %v329, %v337
    %v353 = vadd.f32 %v330, %v337
    %v354 = vadd.f32 %v331, %v337
    %v355 = vmax.f32 %v339, 0.0
    %v356 = vmax.f32 %v340, 0.0
    %v357 = vmax.f32 %v341, 0.0
    %v358 = vmax.f32 %v342, 0.0
    %v359 = vmax.f32 %v343, 0.0
    %v360 = vmax.f32 %v344, 0.0
    %v361 = vmax.f32 %v345, 0.0
    %v362 = vmax.f32 %v346, 0.0
    %v363 = vmax.f32 %v347, 0.0
    %v364 = vmax.f32 %v348, 0.0
    %v365 = vmax.f32 %v349, 0.0
    %v366 = vmax.f32 %v350, 0.0
    %v367 = vmax.f32 %v351, 0.0
    %v368 = vmax.f32 %v352, 0.0
    %v369 = vmax.f32 %v353, 0.0
    %v370 = vmax.f32 %v354, 0.0
    %v371 = vpack.c.bf16 %v356, %v355
    %v372 = vpack.c.bf16 %v358, %v357
    %v373 = vpack.c.bf16 %v360, %v359
    %v374 = vpack.c.bf16 %v362, %v361
    %v375 = vpack.c.bf16 %v364, %v363
    %v376 = vpack.c.bf16 %v366, %v365
    %v377 = vpack.c.bf16 %v368, %v367
    %v378 = vpack.c.bf16 %v370, %v369
    %v387 = vunpack.c.l.b16 %v371
    %v388 = vunpack.c.h.b16 %v371
    %v389 = vunpack.c.l.b16 %v372
    %v390 = vunpack.c.h.b16 %v372
    %v391 = vunpack.c.l.b16 %v373
    %v392 = vunpack.c.h.b16 %v373
    %v393 = vunpack.c.l.b16 %v374
    %v394 = vunpack.c.h.b16 %v374
    %v395 = vunpack.c.l.b16 %v375
    %v396 = vunpack.c.h.b16 %v375
    %v397 = vunpack.c.l.b16 %v376
    %v398 = vunpack.c.h.b16 %v376
    %v399 = vunpack.c.l.b16 %v377
    %v400 = vunpack.c.h.b16 %v377
    %v401 = vunpack.c.l.b16 %v378
    %v402 = vunpack.c.h.b16 %v378
    %v403 = vpack.c.b16 %v387, %v387
    %v404 = vpack.c.b16 %v388, %v388
    %v405 = vpack.c.b16 %v389, %v389
    %v406 = vpack.c.b16 %v390, %v390
    %v407 = vpack.c.b16 %v391, %v391
    %v408 = vpack.c.b16 %v392, %v392
    %v409 = vpack.c.b16 %v393, %v393
    %v410 = vpack.c.b16 %v394, %v394
    %v411 = vpack.c.b16 %v395, %v395
    %v412 = vpack.c.b16 %v396, %v396
    %v413 = vpack.c.b16 %v397, %v397
    %v414 = vpack.c.b16 %v398, %v398
    %v415 = vpack.c.b16 %v399, %v399
    %v416 = vpack.c.b16 %v400, %v400
    %v417 = vpack.c.b16 %v401, %v401
    %v418 = vpack.c.b16 %v402, %v402
    %435 = vst [vmem:[%s3] sm:$0xf] %v403
    %436 = vst [vmem:[%s3 + $0x4] sm:$0xf] %v404
    %437 = vst [vmem:[%s3 + $0x8] sm:$0xf] %v405
    %438 = vst [vmem:[%s3 + $0xc] sm:$0xf] %v406
    %439 = vst [vmem:[%s3 + $0x10] sm:$0xf] %v407
    %440 = vst [vmem:[%s3 + $0x14] sm:$0xf] %v408
    %441 = vst [vmem:[%s3 + $0x18] sm:$0xf] %v409
    %442 = vst [vmem:[%s3 + $0x1c] sm:$0xf] %v410
    %443 = vst [vmem:[%s3 + $0x20] sm:$0xf] %v411
    %444 = vst [vmem:[%s3 + $0x24] sm:$0xf] %v412
    %445 = vst [vmem:[%s3 + $0x28] sm:$0xf] %v413
    %446 = vst [vmem:[%s3 + $0x2c] sm:$0xf] %v414
    %447 = vst [vmem:[%s3 + $0x30] sm:$0xf] %v415
    %448 = vst [vmem:[%s3 + $0x34] sm:$0xf] %v416
    %449 = vst [vmem:[%s3 + $0x38] sm:$0xf] %v417
    %450 = vst [vmem:[%s3 + $0x3c] sm:$0xf] %v418
  $region21: #{emotional_graph_network.2} parent=0 // pred_fallthru
    _
  // Predicated region
  $region22: #{emotional_graph_network.2} parent=0 // pred_check
    _
  $region23: #{emotional_graph_network.2} parent=0 // pred_check_branch
    %452 = sbr.rel (0) target = $region25
  $region24: #{emotional_graph_network.2} parent=0 // pred_region
    _
  $region25: #{emotional_graph_network.2} parent=0 // pred_fallthru
    _
  // Predicated region
  $region26: #{emotional_graph_network.2} parent=0 // pred_check
    _
  $region27: #{emotional_graph_network.2} parent=0 // pred_check_branch
    %454 = sbr.rel (0) target = $region29
  $region28: #{emotional_graph_network.2} parent=0 // pred_region
    _
  $region29: #{emotional_graph_network.2} parent=0 // pred_fallthru
    _

</llo_original>
